<compile_context>
chip_gen: v7x
topology: tpu7x:2x2x1
jax: 0.10.0
libtpu: 0.0.40
codegen_flags: <defaults>
</compile_context>

<pallas_src>
import jax
import jax.numpy as jnp
from jax import lax
from jax.experimental import pallas as pl
from jax.experimental.pallas import tpu as pltpu


def _relu(y):
    return jnp.maximum(y, 0.0)


def _round_up(a, b):
    return -(-a // b) * b


def _vmem_capacity_bytes():
    """Per-core VMEM capacity (v5e/v6e: 128 MiB, v7x: 64 MiB); safe fallback."""
    try:
        info = pltpu.get_tpu_info()
        cap = getattr(info, "vmem_capacity_bytes", None)
        if cap:
            return int(cap)
    except Exception:
        pass
    return 64 * 1024 * 1024  # assume the smallest current part (v7x per-TC)


def _choose_time_tile(T, C, itemsize, budget_bytes, cap):
    """Largest time tile (multiple of 8, <= cap) whose working set fits budget."""
    def footprint(t):
        io = 2 * 3 * t * C * itemsize      # q/k/v tiles, double-buffered
        out = 2 * t * C * 4                # output tile
        acc = t * C * 4                    # f32 accumulator scratch
        scores = t * t * (4 + itemsize)    # f32 scores + compute-dtype copy
        return io + out + acc + scores

    t_full = _round_up(max(T, 1), 8)
    if t_full <= cap and footprint(t_full) <= budget_bytes:
        return t_full                      # whole (padded) T in one tile
    for cand in (512, 384, 256, 128):
        if cand <= cap and footprint(cand) <= budget_bytes:
            return cand
    return 128


# ---------------------------------------------------------------------------
# 1) Projection prologue: q/k/v = x @ (W_{q,k,v} @ W_proj)^T, once per row.
# ---------------------------------------------------------------------------
def _proj_kernel(x_ref, wq_ref, wk_ref, wv_ref, q_ref, k_ref, v_ref):
    x = x_ref[...]
    # preferred_element_type == output dtype: for the bf16 path the MXU result
    # is rounded once on the way out (no extra full-tile VPU cast).
    q_ref[...] = jnp.dot(x, wq_ref[...], preferred_element_type=q_ref.dtype)
    k_ref[...] = jnp.dot(x, wk_ref[...], preferred_element_type=k_ref.dtype)
    v_ref[...] = jnp.dot(x, wv_ref[...], preferred_element_type=v_ref.dtype)


def _project_qkv(x2d, wq_t, wk_t, wv_t, row_tile, vmem_limit):
    rows, C = x2d.shape
    cdt = x2d.dtype
    row_spec = pl.BlockSpec((row_tile, C), lambda i: (i, 0))
    # Whole-array VMEM residents: fetched once and single-buffered (a blocked
    # constant-index spec would double-buffer each weight).
    w_spec = pl.BlockSpec(memory_space=pltpu.MemorySpace.VMEM)
    out_sds = jax.ShapeDtypeStruct((rows, C), cdt)
    return pl.pallas_call(
        _proj_kernel,
        grid=(rows // row_tile,),
        in_specs=[row_spec, w_spec, w_spec, w_spec],
        out_specs=(row_spec, row_spec, row_spec),
        out_shape=(out_sds, out_sds, out_sds),
        compiler_params=pltpu.CompilerParams(
            dimension_semantics=("parallel",),
            vmem_limit_bytes=vmem_limit,
        ),
    )(x2d, wq_t, wk_t, wv_t)


# ---------------------------------------------------------------------------
# 2) Flash-style masked attention over the flattened (qi, kvi) triangle.
# ---------------------------------------------------------------------------
def _make_attn_kernel(non_linearity, last_kv_index):
    def kernel(qi_tbl, kvi_tbl, q_ref, k_ref, v_ref, o_ref, acc_ref):
        p = pl.program_id(1)
        qi = qi_tbl[p]
        kvi = kvi_tbl[p]
        cdt = v_ref.dtype

        def scores():
            # (tile, tile) = q @ k^T, f32 accumulation on the MXU.
            return lax.dot_general(
                q_ref[...], k_ref[...], (((1,), (1,)), ((), ())),
                preferred_element_type=jnp.float32)

        # Diagonal tile: first useful kv tile of this q group -> initialize the
        # accumulator with the causally-masked contribution (keep t >= s).
        @pl.when(kvi == qi)
        def _():
            s = scores()
            row = lax.broadcasted_iota(jnp.int32, s.shape, 0)
            col = lax.broadcasted_iota(jnp.int32, s.shape, 1)
            s = jnp.where(col >= row, s, 0.0)
            acc_ref[...] = jnp.dot(s.astype(cdt), v_ref[...],
                                   preferred_element_type=jnp.float32)

        # Interior tile: every (s, t) in the tile already satisfies t > s, so
        # the iota/compare/select is skipped entirely.
        @pl.when(kvi > qi)
        def _():
            s = scores()
            acc_ref[...] += jnp.dot(s.astype(cdt), v_ref[...],
                                    preferred_element_type=jnp.float32)

        # Last useful kv tile of this q group: non-linearity + store in the
        # natural (T, C) layout (no transposes anywhere in the kernel).
        @pl.when(kvi == last_kv_index)
        def _():
            o_ref[...] = non_linearity(acc_ref[...]).astype(o_ref.dtype)

    return kernel


def block_forward(x, w_proj, w_keys, w_queries, w_values, *,
                  non_linearity=_relu, mxu_dtype=None, time_tile=None):
    """Forward pass of `Block`.

    x   : (B, T, C)
    w_* : (C_out, C_in) nn.Linear weights (bias-free), PyTorch layout.
    mxu_dtype: optional MXU operand dtype (e.g. jnp.bfloat16, recommended on
               v5e); accumulation stays f32.
    """
    B, T, C = x.shape
    out_dtype = x.dtype
    cdt = jnp.dtype(mxu_dtype) if mxu_dtype is not None else jnp.dtype(x.dtype)
    hp = jax.lax.Precision.HIGHEST

    # Fold proj into the q/k/v weights:  q = x @ (Wq @ Wproj)^T, etc.
    f32 = jnp.float32
    wq_t = jnp.matmul(w_queries.astype(f32), w_proj.astype(f32), precision=hp).T
    wk_t = jnp.matmul(w_keys.astype(f32), w_proj.astype(f32), precision=hp).T
    wv_t = jnp.matmul(w_values.astype(f32), w_proj.astype(f32), precision=hp).T
    wq_t, wk_t, wv_t = (w.astype(cdt) for w in (wq_t, wk_t, wv_t))

    # Generation-aware budgets (v7x: 64 MiB/TC -> ~40 MiB limit; 128 MiB parts
    # get bigger tiles and a higher limit).
    vmem_cap = _vmem_capacity_bytes()
    vmem_limit = min(int(vmem_cap * 0.625), 100 * 1024 * 1024)
    tile_cap = 512 if vmem_cap >= 96 * 1024 * 1024 else 256
    itemsize = jnp.dtype(cdt).itemsize

    if time_tile is None:
        tile = _choose_time_tile(T, C, itemsize,
                                 budget_bytes=int(vmem_limit * 0.75),
                                 cap=tile_cap)
    else:
        tile = _round_up(int(time_tile), 8)
    T_pad = _round_up(T, tile)
    n_t = T_pad // tile

    # Pad time with zero rows: zero k/v rows contribute nothing to real rows,
    # and padded q rows are sliced off below -> exact.
    xc = x.astype(cdt)
    if T_pad != T:
        xc = jnp.pad(xc, ((0, 0), (0, T_pad - T), (0, 0)))

    # ---- 1) projection prologue (q/k/v computed exactly once per row) ----
    x2d = xc.reshape(B * T_pad, C)
    q2d, k2d, v2d = _project_qkv(x2d, wq_t, wk_t, wv_t,
                                 row_tile=tile, vmem_limit=vmem_limit)
    q = q2d.reshape(B, T_pad, C)
    k = k2d.reshape(B, T_pad, C)
    v = v2d.reshape(B, T_pad, C)

    # ---- 2) masked-attention kernel over the useful (qi, kvi) pairs only ----
    qi_list, kvi_list = [], []
    for qi in range(n_t):
        for kvi in range(qi, n_t):          # only kvi >= qi survive the mask
            qi_list.append(qi)
            kvi_list.append(kvi)
    qi_tbl = jnp.asarray(qi_list, dtype=jnp.int32)
    kvi_tbl = jnp.asarray(kvi_list, dtype=jnp.int32)
    n_pairs = len(qi_list)

    q_spec = pl.BlockSpec((None, tile, C),
                          lambda b, p, qi_t, kvi_t: (b, qi_t[p], 0))
    kv_spec = pl.BlockSpec((None, tile, C),
                           lambda b, p, qi_t, kvi_t: (b, kvi_t[p], 0))
    o_spec = pl.BlockSpec((None, tile, C),
                          lambda b, p, qi_t, kvi_t: (b, qi_t[p], 0))

    grid_spec = pltpu.PrefetchScalarGridSpec(
        num_scalar_prefetch=2,
        grid=(B, n_pairs),
        in_specs=[q_spec, kv_spec, kv_spec],
        out_specs=o_spec,
        scratch_shapes=[pltpu.VMEM((tile, C), jnp.float32)],
    )

    out = pl.pallas_call(
        _make_attn_kernel(non_linearity, n_t - 1),
        out_shape=jax.ShapeDtypeStruct((B, T_pad, C), out_dtype),
        grid_spec=grid_spec,
        compiler_params=pltpu.CompilerParams(
            # Batch is the megacore-parallel axis (identical work per element);
            # the pair axis is a per-q-group reduction -> arbitrary.
            dimension_semantics=("parallel", "arbitrary"),
            vmem_limit_bytes=vmem_limit,
        ),
    )(qi_tbl, kvi_tbl, q, k, v)

    if T_pad != T:
        out = out[:, :T, :]
    return out


# ---------------------------------------------------------------------------
# Pure-JAX reference mirroring the PyTorch forward (high-precision matmuls).
# ---------------------------------------------------------------------------
def _reference(x, w_proj, w_keys, w_queries, w_values):
    hp = jax.lax.Precision.HIGHEST
    xp = jnp.matmul(x, w_proj.T, precision=hp)
    k = jnp.matmul(xp, w_keys.T, precision=hp)
    q = jnp.matmul(xp, w_queries.T, precision=hp)
    v = jnp.matmul(xp, w_values.T, precision=hp)
    m = jnp.einsum("btc,bsc->bts", k, q, precision=hp)    # k @ q^T
    m = jnp.tril(m)
    y = jnp.einsum("btc,bts->bcs", v, m, precision=hp)    # v^T @ m -> (B, C, T)
    y = jnp.maximum(y, 0.0)                               # ReLU
    return jnp.transpose(y, (0, 2, 1))                    # (B, T, C)


if __name__ == "__main__":
    def run_case(case_key, B, T, C, **kwargs):
        kx, kp, kk, kq, kw = jax.random.split(case_key, 5)
        x = jax.random.normal(kx, (B, T, C), dtype=jnp.float32)
        scale = 1.0 / jnp.sqrt(C)
        w_proj = jax.random.uniform(kp, (C, C), jnp.float32, -scale, scale)
        w_keys = jax.random.uniform(kk, (C, C), jnp.float32, -scale, scale)
        w_queries = jax.random.uniform(kq, (C, C), jnp.float32, -scale, scale)
        w_values = jax.random.uniform(kw, (C, C), jnp.float32, -scale, scale)
        ref = _reference(x, w_proj, w_keys, w_queries, w_values)
        out = block_forward(x, w_proj, w_keys, w_queries, w_values, **kwargs)
        out = jax.block_until_ready(out)
        return out, ref

    root = jax.random.PRNGKey(0)
    k1, k2, k3, k4 = jax.random.split(root, 4)

    # 1) f32 path, single time tile.
    out, ref = run_case(k1, 2, 8, 32)
    assert out.shape == ref.shape
    assert jnp.allclose(out, ref, atol=5e-3, rtol=5e-3), "f32 mismatch vs reference"

    # 2) bf16 MXU operands (f32 accumulation), loose tolerance.
    out, ref = run_case(k2, 2, 8, 32, mxu_dtype=jnp.bfloat16)
    assert jnp.allclose(out.astype(jnp.float32), ref, atol=1e-1, rtol=1e-1), \
        "bf16 mismatch vs reference"

    # 3) multi-tile triangle (exercises diagonal + interior paths, accumulation
    #    across kv tiles, and the pair-flattened grid / scalar prefetch).
    out, ref = run_case(k3, 2, 16, 32, time_tile=8)
    assert jnp.allclose(out, ref, atol=5e-3, rtol=5e-3), "multi-tile mismatch"

    # 4) T not a multiple of the tile (exercises zero-padding + output slice).
    out, ref = run_case(k4, 1, 12, 32, time_tile=8)
    assert jnp.allclose(out, ref, atol=5e-3, rtol=5e-3), "padded-T mismatch"

    print("KERNEL_OK")
</pallas_src>

<mosaic_0001>
module attributes {stable_mosaic.version = 11 : i64} {
  func.func @_proj_kernel(%arg0: i32, %arg1: memref<8x32xf32, #tpu.memory_space<vmem>>, %arg2: memref<32x32xf32, #tpu.memory_space<vmem>>, %arg3: memref<32x32xf32, #tpu.memory_space<vmem>>, %arg4: memref<32x32xf32, #tpu.memory_space<vmem>>, %arg5: memref<8x32xf32, #tpu.memory_space<vmem>>, %arg6: memref<8x32xf32, #tpu.memory_space<vmem>>, %arg7: memref<8x32xf32, #tpu.memory_space<vmem>>) attributes {dimension_semantics = [#tpu.dimension_semantics<parallel>], iteration_bounds = array<i64: 2>, scalar_prefetch = 0 : i64, scratch_operands = 0 : i64, tpu.core_type = #tpu.core_type<tc>, window_params = [{transform_indices = @transform_0, window_bounds = array<i64: 8, 32>}, {pipeline_mode = #tpu.pipeline_mode<synchronous>, transform_indices = @transform_1, window_bounds = array<i64: 32, 32>}, {pipeline_mode = #tpu.pipeline_mode<synchronous>, transform_indices = @transform_2, window_bounds = array<i64: 32, 32>}, {pipeline_mode = #tpu.pipeline_mode<synchronous>, transform_indices = @transform_3, window_bounds = array<i64: 32, 32>}, {transform_indices = @transform_4, window_bounds = array<i64: 8, 32>}, {transform_indices = @transform_5, window_bounds = array<i64: 8, 32>}, {transform_indices = @transform_6, window_bounds = array<i64: 8, 32>}]} {
    %c0 = arith.constant 0 : index
    %c0_0 = arith.constant 0 : index
    %0 = vector.load %arg1[%c0, %c0_0] : memref<8x32xf32, #tpu.memory_space<vmem>>, vector<8x32xf32>
    %c0_1 = arith.constant 0 : index
    %c0_2 = arith.constant 0 : index
    %1 = vector.load %arg2[%c0_1, %c0_2] : memref<32x32xf32, #tpu.memory_space<vmem>>, vector<32x32xf32>
    %cst = arith.constant dense<0.000000e+00> : vector<8x32xf32>
    %2 = tpu.matmul %0, %1, %cst {dimension_numbers = #tpu.dot_dimension_numbers<[1], [0], [0], [1], [0, 0, 1, 1], [], []>} : vector<8x32xf32>, vector<32x32xf32>, vector<8x32xf32> -> vector<8x32xf32>
    %c0_3 = arith.constant 0 : index
    %c0_4 = arith.constant 0 : index
    %3 = vector.load %arg5[%c0_3, %c0_4] : memref<8x32xf32, #tpu.memory_space<vmem>>, vector<8x32xf32>
    tpu.vector_store %arg5[%c0_3, %c0_4], %2 {strides = array<i32>} : memref<8x32xf32, #tpu.memory_space<vmem>>, vector<8x32xf32>,
    %c0_5 = arith.constant 0 : index
    %c0_6 = arith.constant 0 : index
    %4 = vector.load %arg3[%c0_5, %c0_6] : memref<32x32xf32, #tpu.memory_space<vmem>>, vector<32x32xf32>
    %cst_7 = arith.constant dense<0.000000e+00> : vector<8x32xf32>
    %5 = tpu.matmul %0, %4, %cst_7 {dimension_numbers = #tpu.dot_dimension_numbers<[1], [0], [0], [1], [0, 0, 1, 1], [], []>} : vector<8x32xf32>, vector<32x32xf32>, vector<8x32xf32> -> vector<8x32xf32>
    %c0_8 = arith.constant 0 : index
    %c0_9 = arith.constant 0 : index
    %6 = vector.load %arg6[%c0_8, %c0_9] : memref<8x32xf32, #tpu.memory_space<vmem>>, vector<8x32xf32>
    tpu.vector_store %arg6[%c0_8, %c0_9], %5 {strides = array<i32>} : memref<8x32xf32, #tpu.memory_space<vmem>>, vector<8x32xf32>,
    %c0_10 = arith.constant 0 : index
    %c0_11 = arith.constant 0 : index
    %7 = vector.load %arg4[%c0_10, %c0_11] : memref<32x32xf32, #tpu.memory_space<vmem>>, vector<32x32xf32>
    %cst_12 = arith.constant dense<0.000000e+00> : vector<8x32xf32>
    %8 = tpu.matmul %0, %7, %cst_12 {dimension_numbers = #tpu.dot_dimension_numbers<[1], [0], [0], [1], [0, 0, 1, 1], [], []>} : vector<8x32xf32>, vector<32x32xf32>, vector<8x32xf32> -> vector<8x32xf32>
    %c0_13 = arith.constant 0 : index
    %c0_14 = arith.constant 0 : index
    %9 = vector.load %arg7[%c0_13, %c0_14] : memref<8x32xf32, #tpu.memory_space<vmem>>, vector<8x32xf32>
    tpu.vector_store %arg7[%c0_13, %c0_14], %8 {strides = array<i32>} : memref<8x32xf32, #tpu.memory_space<vmem>>, vector<8x32xf32>,
    return
  }
  func.func @transform_0(%arg0: i32) -> (i32, i32) {
    %c0_i32 = arith.constant 0 : i32
    %c0_i32_0 = arith.constant 0 : i32
    return %arg0, %c0_i32 : i32, i32
  }
  func.func @transform_1(%arg0: i32) -> (i32, i32) {
    %c0_i32 = arith.constant 0 : i32
    %c0_i32_0 = arith.constant 0 : i32
    %c0_i32_1 = arith.constant 0 : i32
    return %c0_i32, %c0_i32_0 : i32, i32
  }
  func.func @transform_2(%arg0: i32) -> (i32, i32) {
    %c0_i32 = arith.constant 0 : i32
    %c0_i32_0 = arith.constant 0 : i32
    %c0_i32_1 = arith.constant 0 : i32
    return %c0_i32, %c0_i32_0 : i32, i32
  }
  func.func @transform_3(%arg0: i32) -> (i32, i32) {
    %c0_i32 = arith.constant 0 : i32
    %c0_i32_0 = arith.constant 0 : i32
    %c0_i32_1 = arith.constant 0 : i32
    return %c0_i32, %c0_i32_0 : i32, i32
  }
  func.func @transform_4(%arg0: i32) -> (i32, i32) {
    %c0_i32 = arith.constant 0 : i32
    %c0_i32_0 = arith.constant 0 : i32
    return %arg0, %c0_i32 : i32, i32
  }
  func.func @transform_5(%arg0: i32) -> (i32, i32) {
    %c0_i32 = arith.constant 0 : i32
    %c0_i32_0 = arith.constant 0 : i32
    return %arg0, %c0_i32 : i32, i32
  }
  func.func @transform_6(%arg0: i32) -> (i32, i32) {
    %c0_i32 = arith.constant 0 : i32
    %c0_i32_0 = arith.constant 0 : i32
    return %arg0, %c0_i32 : i32, i32
  }
}

</mosaic_0001>

<llo_original>
// kernel: tpu_custom_call.1
$region0: #{tpu_custom_call.1}
  #allocation0 [shape = 'u32[]', space=smem, size = 0x4, offset = 0x4, fixed_abs, tag = 'smem constant byte address 0x4 - core index']
  #allocation1 [shape = 'u32[144,128]{1,0:T(1,128)}', space=vmem, size = 0x12000, scoped, tag = 'internal scratch']
  %s0 = inlined_call_operand.hbm [shape: f32[16,32], index: 0, kind: input, shape index: {}]
  %s1 = inlined_call_operand.hbm [shape: f32[32,32], index: 1, kind: input, shape index: {}]
  %s2 = inlined_call_operand.hbm [shape: f32[32,32], index: 2, kind: input, shape index: {}]
  %s3 = inlined_call_operand.hbm [shape: f32[32,32], index: 3, kind: input, shape index: {}]
  %s4 = inlined_call_operand.hbm [shape: f32[16,32], index: 4, kind: output, shape index: {0}]
  %s5 = inlined_call_operand.hbm [shape: f32[16,32], index: 5, kind: output, shape index: {1}]
  %s6 = inlined_call_operand.hbm [shape: f32[16,32], index: 6, kind: output, shape index: {2}]
  %7 = xla_tuple %s4, %s5, %s6
  %s8 = sld [smem:[#allocation0]]
  $region81: #{tpu_custom_call.1} parent=0
    _
  %s10 = ssub.s32 1, %s8
  %s11 = scalar_select 0, %s10, %s8
  $region1: #{tpu_custom_call.1} parent=0
    #allocation2 [shape = 'u8[8192]{0}', space=vmem, size = 0x2000, scoped, tag = 'input window, operand 0']
    #allocation3 [shape = 's32[2]{0}', space=sflag, size = 0x8, scoped, tag = 'scoped memory for tpu_custom_call.1']
    #allocation4 [shape = 's32[2]{0}', space=sflag, size = 0x8, scoped, tag = 'scoped memory for tpu_custom_call.1']
    #allocation5 [shape = 'u8[16384]{0}', space=vmem, size = 0x4000, scoped, tag = 'input window, operand 1, single buffered']
    #allocation6 [shape = 's32[1]{0}', space=sflag, size = 0x4, scoped, tag = 'scoped memory for tpu_custom_call.1']
    #allocation7 [shape = 'u8[16384]{0}', space=vmem, size = 0x4000, scoped, tag = 'input window, operand 2, single buffered']
    #allocation8 [shape = 'u8[16384]{0}', space=vmem, size = 0x4000, scoped, tag = 'input window, operand 3, single buffered']
    #allocation9 [shape = 's32[1]{0}', space=sflag, size = 0x4, scoped, tag = 'scoped memory for tpu_custom_call.1']
    #allocation10 [shape = 'u8[8192]{0}', space=vmem, size = 0x2000, scoped, tag = 'output window, operand 0']
    #allocation11 [shape = 'u8[8192]{0}', space=vmem, size = 0x2000, scoped, tag = 'output window, operand 1']
    #allocation12 [shape = 's32[2]{0}', space=sflag, size = 0x8, scoped, tag = 'scoped memory for tpu_custom_call.1']
    #allocation13 [shape = 'u8[8192]{0}', space=vmem, size = 0x2000, scoped, tag = 'output window, operand 2']
    %12 = vsyncpa [#allocation3], 0
    %s13 = scalar_lea.sflag [#allocation3], 1
    %14 = vsyncpa %s13, 0
    %15 = vsyncpa [#allocation6], 0
    %16 = vsyncpa [#allocation9], 0
    %17 = vsyncpa [#allocation4], 0
    %s18 = scalar_lea.sflag [#allocation4], 1
    %19 = vsyncpa %s18, 0
    %20 = vsyncpa [#allocation12], 0
    %s21 = scalar_lea.sflag [#allocation12], 1
    %22 = vsyncpa %s21, 0
    loop: start=0, step=1, limit=4
    $region2: #{tpu_custom_call.1} parent=1 // loop_pre_header
      _
    $region3: #{tpu_custom_call.1} parent=1 // loop_header
      %s24 = sphi 0, %s28
      %p25 = scmp.ge.s32.totalorder %s24, 4
      %s34 = sphi 0, %s36
      %s37 = sphi 0, %s34
      %s38 = sphi 0, %s37
      %s54 = sphi 0, %s38
      %s58 = sphi 0, %s58
      %s60 = sphi 0, %s58
      %s61 = sphi 0, %s60
      %s75 = sphi 0, %s61
      %s79 = sphi 0, %s79
      %s81 = sphi 0, %s79
      %s82 = sphi 0, %s81
      %s96 = sphi 0, %s82
      %s100 = sphi 0, %s100
      %s102 = sphi 0, %s100
      %s103 = sphi 0, %s102
      %s117 = sphi 0, %s103
      %s123 = sphi 0, %s125
      %s126 = sphi 0, %s123
      %s127 = sphi 0, %s126
      %s143 = sphi 0, %s127
      %s149 = sphi 0, %s151
      %s152 = sphi 0, %s149
      %s153 = sphi 0, %s152
      %s169 = sphi 0, %s153
      %s175 = sphi 0, %s177
      %s178 = sphi 0, %s175
      %s179 = sphi 0, %s178
      %s195 = sphi 0, %s179
    $region4: #{tpu_custom_call.1} parent=1 // loop_header_branch
      %27 = sbr.rel (%p25) target = $region8
    $region5: #{tpu_custom_call.1} parent=1 // loop_body
      %s29 = ssub.s32 %s24, 1
      %s30 = ssub.s32 %s24, 2
      %s31 = sadd.s32 %s24, 1
      %s32 = ssub.s32 %s24, %s31
      %p33 = scmp.eq.s32.totalorder %s32, 0
      %s35 = sadd.s32 %s34, 1
      %s36 = scalar_select %p33, %s34, %s35
      %p39 = pneg %p33
      %p40 = scmp.eq.s32.totalorder %s24, 1
      %p41 = por %p39, %p40
      %p42 = scmp.ne.s32.totalorder %s34, %s37
      %p43 = scmp.eq.s32.totalorder %s24, 0
      %p44 = por %p42, %p43
      %p45 = scmp.ne.s32.totalorder %s34, %s37
      %p46 = scmp.eq.s32.totalorder %s29, 1
      %p47 = por %p45, %p46
      %p48 = scmp.ne.s32.totalorder %s37, %s38
      %p49 = scmp.eq.s32.totalorder %s29, 0
      %p50 = por %p48, %p49
      %p51 = scmp.ne.s32.totalorder %s37, %s38
      %p52 = scmp.eq.s32.totalorder %s30, 1
      %p53 = por %p51, %p52
      %p55 = scmp.ne.s32.totalorder %s38, %s54
      %p56 = scmp.eq.s32.totalorder %s30, 0
      %p57 = por %p55, %p56
      %s59 = sadd.s32 %s58, 1
      %p62 = scmp.eq.s32.totalorder %s24, 1
      %p63 = scmp.ne.s32.totalorder %s58, %s60
      %p64 = scmp.eq.s32.totalorder %s24, 0
      %p65 = por %p63, %p64
      %p66 = scmp.ne.s32.totalorder %s58, %s60
      %p67 = scmp.eq.s32.totalorder %s29, 1
      %p68 = por %p66, %p67
      %p69 = scmp.ne.s32.totalorder %s60, %s61
      %p70 = scmp.eq.s32.totalorder %s29, 0
      %p71 = por %p69, %p70
      %p72 = scmp.ne.s32.totalorder %s60, %s61
      %p73 = scmp.eq.s32.totalorder %s30, 1
      %p74 = por %p72, %p73
      %p76 = scmp.ne.s32.totalorder %s61, %s75
      %p77 = scmp.eq.s32.totalorder %s30, 0
      %p78 = por %p76, %p77
      %s80 = sadd.s32 %s79, 1
      %p83 = scmp.eq.s32.totalorder %s24, 1
      %p84 = scmp.ne.s32.totalorder %s79, %s81
      %p85 = scmp.eq.s32.totalorder %s24, 0
      %p86 = por %p84, %p85
      %p87 = scmp.ne.s32.totalorder %s79, %s81
      %p88 = scmp.eq.s32.totalorder %s29, 1
      %p89 = por %p87, %p88
      %p90 = scmp.ne.s32.totalorder %s81, %s82
      %p91 = scmp.eq.s32.totalorder %s29, 0
      %p92 = por %p90, %p91
      %p93 = scmp.ne.s32.totalorder %s81, %s82
      %p94 = scmp.eq.s32.totalorder %s30, 1
      %p95 = por %p93, %p94
      %p97 = scmp.ne.s32.totalorder %s82, %s96
      %p98 = scmp.eq.s32.totalorder %s30, 0
      %p99 = por %p97, %p98
      %s101 = sadd.s32 %s100, 1
      %p104 = scmp.eq.s32.totalorder %s24, 1
      %p105 = scmp.ne.s32.totalorder %s100, %s102
      %p106 = scmp.eq.s32.totalorder %s24, 0
      %p107 = por %p105, %p106
      %p108 = scmp.ne.s32.totalorder %s100, %s102
      %p109 = scmp.eq.s32.totalorder %s29, 1
      %p110 = por %p108, %p109
      %p111 = scmp.ne.s32.totalorder %s102, %s103
      %p112 = scmp.eq.s32.totalorder %s29, 0
      %p113 = por %p111, %p112
      %p114 = scmp.ne.s32.totalorder %s102, %s103
      %p115 = scmp.eq.s32.totalorder %s30, 1
      %p116 = por %p114, %p115
      %p118 = scmp.ne.s32.totalorder %s103, %s117
      %p119 = scmp.eq.s32.totalorder %s30, 0
      %p120 = por %p118, %p119
      %s121 = ssub.s32 %s24, %s31
      %p122 = scmp.eq.s32.totalorder %s121, 0
      %s124 = sadd.s32 %s123, 1
      %s125 = scalar_select %p122, %s123, %s124
      %p128 = pneg %p122
      %p129 = scmp.eq.s32.totalorder %s24, 1
      %p130 = por %p128, %p129
      %p131 = scmp.ne.s32.totalorder %s123, %s126
      %p132 = scmp.eq.s32.totalorder %s24, 0
      %p133 = por %p131, %p132
      %p134 = scmp.ne.s32.totalorder %s123, %s126
      %p135 = scmp.eq.s32.totalorder %s29, 1
      %p136 = por %p134, %p135
      %p137 = scmp.ne.s32.totalorder %s126, %s127
      %p138 = scmp.eq.s32.totalorder %s29, 0
      %p139 = por %p137, %p138
      %p140 = scmp.ne.s32.totalorder %s126, %s127
      %p141 = scmp.eq.s32.totalorder %s30, 1
      %p142 = por %p140, %p141
      %p144 = scmp.ne.s32.totalorder %s127, %s143
      %p145 = scmp.eq.s32.totalorder %s30, 0
      %p146 = por %p144, %p145
      %s147 = ssub.s32 %s24, %s31
      %p148 = scmp.eq.s32.totalorder %s147, 0
      %s150 = sadd.s32 %s149, 1
      %s151 = scalar_select %p148, %s149, %s150
      %p154 = pneg %p148
      %p155 = scmp.eq.s32.totalorder %s24, 1
      %p156 = por %p154, %p155
      %p157 = scmp.ne.s32.totalorder %s149, %s152
      %p158 = scmp.eq.s32.totalorder %s24, 0
      %p159 = por %p157, %p158
      %p160 = scmp.ne.s32.totalorder %s149, %s152
      %p161 = scmp.eq.s32.totalorder %s29, 1
      %p162 = por %p160, %p161
      %p163 = scmp.ne.s32.totalorder %s152, %s153
      %p164 = scmp.eq.s32.totalorder %s29, 0
      %p165 = por %p163, %p164
      %p166 = scmp.ne.s32.totalorder %s152, %s153
      %p167 = scmp.eq.s32.totalorder %s30, 1
      %p168 = por %p166, %p167
      %p170 = scmp.ne.s32.totalorder %s153, %s169
      %p171 = scmp.eq.s32.totalorder %s30, 0
      %p172 = por %p170, %p171
      %s173 = ssub.s32 %s24, %s31
      %p174 = scmp.eq.s32.totalorder %s173, 0
      %s176 = sadd.s32 %s175, 1
      %s177 = scalar_select %p174, %s175, %s176
      %p180 = pneg %p174
      %p181 = scmp.eq.s32.totalorder %s24, 1
      %p182 = por %p180, %p181
      %p183 = scmp.ne.s32.totalorder %s175, %s178
      %p184 = scmp.eq.s32.totalorder %s24, 0
      %p185 = por %p183, %p184
      %p186 = scmp.ne.s32.totalorder %s175, %s178
      %p187 = scmp.eq.s32.totalorder %s29, 1
      %p188 = por %p186, %p187
      %p189 = scmp.ne.s32.totalorder %s178, %s179
      %p190 = scmp.eq.s32.totalorder %s29, 0
      %p191 = por %p189, %p190
      %p192 = scmp.ne.s32.totalorder %s178, %s179
      %p193 = scmp.eq.s32.totalorder %s30, 1
      %p194 = por %p192, %p193
      %p196 = scmp.ne.s32.totalorder %s179, %s195
      %p197 = scmp.eq.s32.totalorder %s30, 0
      %p198 = por %p196, %p197
      %p199 = scmp.le.s32.totalorder 1, %s24
      %p200 = scmp.lt.s32.totalorder %s24, 3
      %p201 = pnand %p199, %p200
      %p202 = pneg %p201
      // Predicated region
      $region9: #{tpu_custom_call.1} parent=5 // pred_check
        _
      $region10: #{tpu_custom_call.1} parent=5 // pred_check_branch
        %204 = sbr.rel (%p201) target = $region12
      $region11: #{tpu_custom_call.1} parent=5 // pred_region
        %s205 = ssub.s32 %s24, 1
        // Predicated region
        $region13: #{tpu_custom_call.1} parent=11 // pred_check
          %p206 = pneg %p71
        $region14: #{tpu_custom_call.1} parent=11 // pred_check_branch
          %208 = sbr.rel (%p206) target = $region16
        $region15: #{tpu_custom_call.1} parent=11 // pred_region
          %s210 = ssub.s32 512, 512
          %211 = vsyncadd [#allocation6], %s210
          %s212 = sshll.u32 [#allocation5], 4
          %s213 = int_to_ptr.vmem [resolvable:$true] %s212
          %218 = dma.hbm_to_vmem [thread:$0]  %s1, 512, %s213, [#allocation6], 128, 128, 8
        $region16: #{tpu_custom_call.1} parent=11 // pred_fallthru
          _
        // Predicated region
        $region17: #{tpu_custom_call.1} parent=11 // pred_check
          %p219 = pneg %p92
        $region18: #{tpu_custom_call.1} parent=11 // pred_check_branch
          %221 = sbr.rel (%p219) target = $region20
        $region19: #{tpu_custom_call.1} parent=11 // pred_region
          %s223 = ssub.s32 512, 512
          %224 = vsyncadd [#allocation6], %s223
          %s225 = sshll.u32 [#allocation7], 4
          %s226 = int_to_ptr.vmem [resolvable:$true] %s225
          %231 = dma.hbm_to_vmem [thread:$0]  %s2, 512, %s226, [#allocation6], 128, 128, 8
        $region20: #{tpu_custom_call.1} parent=11 // pred_fallthru
          _
        // Predicated region
        $region21: #{tpu_custom_call.1} parent=11 // pred_check
          %p232 = pneg %p113
        $region22: #{tpu_custom_call.1} parent=11 // pred_check_branch
          %234 = sbr.rel (%p232) target = $region24
        $region23: #{tpu_custom_call.1} parent=11 // pred_region
          %s236 = ssub.s32 512, 512
          %237 = vsyncadd [#allocation9], %s236
          %s238 = sshll.u32 [#allocation8], 4
          %s239 = int_to_ptr.vmem [resolvable:$true] %s238
          %244 = dma.hbm_to_vmem [thread:$0]  %s3, 512, %s239, [#allocation9], 128, 128, 8
        $region24: #{tpu_custom_call.1} parent=11 // pred_fallthru
          _
      $region12: #{tpu_custom_call.1} parent=5 // pred_fallthru
        _
      %p245 = scmp.lt.s32.totalorder %s24, 2
      // Predicated region
      $region25: #{tpu_custom_call.1} parent=5 // pred_check
        %p246 = pneg %p245
      $region26: #{tpu_custom_call.1} parent=5 // pred_check_branch
        %248 = sbr.rel (%p246) target = $region28
      $region27: #{tpu_custom_call.1} parent=5 // pred_region
        // Predicated region
        $region29: #{tpu_custom_call.1} parent=27 // pred_check
          %p249 = pneg %p44
        $region30: #{tpu_custom_call.1} parent=27 // pred_check_branch
          %251 = sbr.rel (%p249) target = $region32
        $region31: #{tpu_custom_call.1} parent=27 // pred_region
          %s252 = sand.u32 %s34, 1
          %s253 = scalar_lea.sflag [#allocation3], %s252
          %s254 = sand.u32 %s34, 1
          %s255 = smul.addr %s254, 8
          %s256 = scalar_lea.vmem [#allocation2], %s255
          %s258 = ssub.s32 128, 128
          %259 = vsyncadd %s253, %s258
          %s260 = smul.addr %s24, 128
          %s261 = scalar_lea.hbm %s0, %s260
          %s263 = sshll.u32 %s256, 4
          %s264 = int_to_ptr.vmem [resolvable:$true] %s263
          %266 = dma.hbm_to_vmem [thread:$0]  %s261, 128, %s264, %s253
        $region32: #{tpu_custom_call.1} parent=27 // pred_fallthru
          _
      $region28: #{tpu_custom_call.1} parent=5 // pred_fallthru
        _
      %p267 = scmp.le.s32.totalorder 1, %s24
      %p268 = scmp.lt.s32.totalorder %s24, 3
      %p269 = pnand %p267, %p268
      %p270 = pneg %p269
      // Predicated region
      $region33: #{tpu_custom_call.1} parent=5 // pred_check
        _
      $region34: #{tpu_custom_call.1} parent=5 // pred_check_branch
        %272 = sbr.rel (%p269) target = $region36
      $region35: #{tpu_custom_call.1} parent=5 // pred_region
        %s273 = ssub.s32 %s24, 1
        %s274 = sand.u32 %s37, 1
        %s275 = scalar_lea.sflag [#allocation3], %s274
        %s276 = sand.u32 %s37, 1
        %s277 = smul.addr %s276, 8
        %s278 = scalar_lea.vmem [#allocation2], %s277
        // Predicated region
        $region37: #{tpu_custom_call.1} parent=35 // pred_check
          %p279 = pneg %p50
        $region38: #{tpu_custom_call.1} parent=35 // pred_check_branch
          %281 = sbr.rel (%p279) target = $region40
        $region39: #{tpu_custom_call.1} parent=35 // pred_region
          %282 = dma.done %s275, 128
        $region40: #{tpu_custom_call.1} parent=35 // pred_fallthru
          _
        // Predicated region
        $region41: #{tpu_custom_call.1} parent=35 // pred_check
          %p283 = pneg %p71
        $region42: #{tpu_custom_call.1} parent=35 // pred_check_branch
          %285 = sbr.rel (%p283) target = $region44
        $region43: #{tpu_custom_call.1} parent=35 // pred_region
          %286 = dma.done [#allocation6], 512
        $region44: #{tpu_custom_call.1} parent=35 // pred_fallthru
          _
        // Predicated region
        $region45: #{tpu_custom_call.1} parent=35 // pred_check
          %p287 = pneg %p92
        $region46: #{tpu_custom_call.1} parent=35 // pred_check_branch
          %289 = sbr.rel (%p287) target = $region48
        $region47: #{tpu_custom_call.1} parent=35 // pred_region
          %290 = dma.done [#allocation6], 512
        $region48: #{tpu_custom_call.1} parent=35 // pred_fallthru
          _
        // Predicated region
        $region49: #{tpu_custom_call.1} parent=35 // pred_check
          %p291 = pneg %p113
        $region50: #{tpu_custom_call.1} parent=35 // pred_check_branch
          %293 = sbr.rel (%p291) target = $region52
        $region51: #{tpu_custom_call.1} parent=35 // pred_region
          %294 = dma.done [#allocation9], 512
        $region52: #{tpu_custom_call.1} parent=35 // pred_fallthru
          _
        %s295 = sand.u32 %s37, 1
        %s296 = scalar_lea.sflag [#allocation3], %s295
        %s297 = sand.u32 %s37, 1
        %s298 = smul.addr %s297, 8
        %s299 = scalar_lea.vmem [#allocation2], %s298
        %p300 = pneg %p50
        %p301 = pneg %p47
        %p302 = pneg %p71
        %p303 = pneg %p68
        %p304 = pneg %p92
        %p305 = pneg %p89
        %p306 = pneg %p113
        %p307 = pneg %p110
        %p308 = pneg %p139
        %p309 = pneg %p136
        %s310 = sand.u32 %s126, 1
        %s311 = scalar_lea.sflag [#allocation4], %s310
        %s312 = sand.u32 %s126, 1
        %s313 = smul.addr %s312, 8
        %s314 = scalar_lea.vmem [#allocation10], %s313
        %p315 = pneg %p165
        %p316 = pneg %p162
        %s317 = sand.u32 %s29, 1
        %s318 = scalar_lea.sflag [#allocation12], %s317
        %s319 = sand.u32 %s152, 1
        %s320 = smul.addr %s319, 8
        %s321 = scalar_lea.vmem [#allocation11], %s320
        %p322 = pneg %p191
        %p323 = pneg %p188
        %s324 = sand.u32 %s29, 1
        %s325 = scalar_lea.sflag [#allocation12], %s324
        %s326 = sand.u32 %s178, 1
        %s327 = smul.addr %s326, 8
        %s328 = scalar_lea.vmem [#allocation13], %s327
        %v329 = vld [vmem:[%s278] sm:$0xff]
        %v330 = vld [vmem:[#allocation5] sm:$0xff]
        %v331 = vld [vmem:[#allocation5 + $0x8] sm:$0xff]
        %v332 = vld [vmem:[#allocation5 + $0x10] sm:$0xff]
        %v333 = vld [vmem:[#allocation5 + $0x18] sm:$0xff]
        %vm334 = vcmask 261120
        %v336 = vsel %vm334, %v329, 0
        %338 = vmatprep.subr.mxu0 0.0
        %339 = vmatpush1.msra.mxu0 %v330
        %340 = vmatprep.subr.mxu0 0.0
        %341 = vmatpush1.msra.mxu0 %v331
        %342 = vmatprep.subr.mxu0 0.0
        %343 = vmatpush1.msra.mxu0 %v332
        %344 = vmatprep.subr.mxu0 0.0
        %345 = vmatpush1.msra.mxu0 %v333
        %346 = vmatprep.subr.mxu0 0.0
        %347 = vmatpush1.msra.mxu0 0.0
        %348 = vmatprep.subr.mxu0 0.0
        %349 = vmatpush1.msra.mxu0 0.0
        %350 = vmatprep.subr.mxu0 0.0
        %351 = vmatpush1.msra.mxu0 0.0
        %352 = vmatprep.subr.mxu0 0.0
        %353 = vmatpush1.msra.mxu0 0.0
        %354 = vmatprep.subr.mxu0 0.0
        %355 = vmatpush1.msra.mxu0 0.0
        %356 = vmatprep.subr.mxu0 0.0
        %357 = vmatpush1.msra.mxu0 0.0
        %358 = vmatprep.subr.mxu0 0.0
        %359 = vmatpush1.msra.mxu0 0.0
        %360 = vmatprep.subr.mxu0 0.0
        %361 = vmatpush1.msra.mxu0 0.0
        %362 = vmatprep.subr.mxu0 0.0
        %363 = vmatpush1.msra.mxu0 0.0
        %364 = vmatprep.subr.mxu0 0.0
        %365 = vmatpush1.msra.mxu0 0.0
        %366 = vmatprep.subr.mxu0 0.0
        %367 = vmatpush1.msra.mxu0 0.0
        %368 = vmatprep.subr.mxu0 0.0
        %369 = vmatpush1.msra.mxu0 0.0
        %370 = vmatprep.subr.mxu0 0.0
        %371 = vmatpush1.msra.mxu0 0.0
        %372 = vmatprep.subr.mxu0 0.0
        %373 = vmatpush1.msra.mxu0 0.0
        %374 = vmatprep.subr.mxu0 0.0
        %375 = vmatpush1.msra.mxu0 0.0
        %376 = vmatprep.subr.mxu0 0.0
        %377 = vmatpush1.msra.mxu0 0.0
        %378 = vmatprep.subr.mxu0 0.0
        %379 = vmatpush1.msra.mxu0 0.0
        %380 = vmatprep.subr.mxu0 0.0
        %381 = vmatpush1.msra.mxu0 0.0
        %382 = vmatprep.subr.mxu0 0.0
        %383 = vmatpush1.msra.mxu0 0.0
        %384 = vmatprep.subr.mxu0 0.0
        %385 = vmatpush1.msra.mxu0 0.0
        %386 = vmatprep.subr.mxu0 0.0
        %387 = vmatpush1.msra.mxu0 0.0
        %388 = vmatprep.subr.mxu0 0.0
        %389 = vmatpush1.msra.mxu0 0.0
        %390 = vmatprep.subr.mxu0 0.0
        %391 = vmatpush1.msra.mxu0 0.0
        %392 = vmatprep.subr.mxu0 0.0
        %393 = vmatpush1.msra.mxu0 0.0
        %394 = vmatprep.subr.mxu0 0.0
        %395 = vmatpush1.msra.mxu0 0.0
        %396 = vmatprep.subr.mxu0 0.0
        %397 = vmatpush1.msra.mxu0 0.0
        %398 = vmatprep.subr.mxu0 0.0
        %399 = vmatpush1.msra.mxu0 0.0
        %400 = vmatprep.subr.mxu0 0.0
        %401 = vmatpush1.msra.mxu0 0.0
        %402 = vmatprep.mubr.f32.mxu0 0.0
        %403 = vmatmul.mubr.f32.gmra.mrb[0].mxu0 %v336
        %v404 = vpop.f32.mrb[0].mxu0
        %v405 = vadd.f32 0.0, %v404
        %v406 = vpop.f32.mrb[0].mxu0
        %407 = vdwg.mxu0
        %408 = vst.msk [vmem:[%s314] sm:$0xff] %vm334, %v405
        %v409 = vld [vmem:[#allocation7] sm:$0xff]
        %v410 = vld [vmem:[#allocation7 + $0x8] sm:$0xff]
        %v411 = vld [vmem:[#allocation7 + $0x10] sm:$0xff]
        %v412 = vld [vmem:[#allocation7 + $0x18] sm:$0xff]
        %413 = vmatprep.subr.mxu0 0.0
        %414 = vmatpush1.msra.mxu0 %v409
        %415 = vmatprep.subr.mxu0 0.0
        %416 = vmatpush1.msra.mxu0 %v410
        %417 = vmatprep.subr.mxu0 0.0
        %418 = vmatpush1.msra.mxu0 %v411
        %419 = vmatprep.subr.mxu0 0.0
        %420 = vmatpush1.msra.mxu0 %v412
        %421 = vmatprep.subr.mxu0 0.0
        %422 = vmatpush1.msra.mxu0 0.0
        %423 = vmatprep.subr.mxu0 0.0
        %424 = vmatpush1.msra.mxu0 0.0
        %425 = vmatprep.subr.mxu0 0.0
        %426 = vmatpush1.msra.mxu0 0.0
        %427 = vmatprep.subr.mxu0 0.0
        %428 = vmatpush1.msra.mxu0 0.0
        %429 = vmatprep.subr.mxu0 0.0
        %430 = vmatpush1.msra.mxu0 0.0
        %431 = vmatprep.subr.mxu0 0.0
        %432 = vmatpush1.msra.mxu0 0.0
        %433 = vmatprep.subr.mxu0 0.0
        %434 = vmatpush1.msra.mxu0 0.0
        %435 = vmatprep.subr.mxu0 0.0
        %436 = vmatpush1.msra.mxu0 0.0
        %437 = vmatprep.subr.mxu0 0.0
        %438 = vmatpush1.msra.mxu0 0.0
        %439 = vmatprep.subr.mxu0 0.0
        %440 = vmatpush1.msra.mxu0 0.0
        %441 = vmatprep.subr.mxu0 0.0
        %442 = vmatpush1.msra.mxu0 0.0
        %443 = vmatprep.subr.mxu0 0.0
        %444 = vmatpush1.msra.mxu0 0.0
        %445 = vmatprep.subr.mxu0 0.0
        %446 = vmatpush1.msra.mxu0 0.0
        %447 = vmatprep.subr.mxu0 0.0
        %448 = vmatpush1.msra.mxu0 0.0
        %449 = vmatprep.subr.mxu0 0.0
        %450 = vmatpush1.msra.mxu0 0.0
        %451 = vmatprep.subr.mxu0 0.0
        %452 = vmatpush1.msra.mxu0 0.0
        %453 = vmatprep.subr.mxu0 0.0
        %454 = vmatpush1.msra.mxu0 0.0
        %455 = vmatprep.subr.mxu0 0.0
        %456 = vmatpush1.msra.mxu0 0.0
        %457 = vmatprep.subr.mxu0 0.0
        %458 = vmatpush1.msra.mxu0 0.0
        %459 = vmatprep.subr.mxu0 0.0
        %460 = vmatpush1.msra.mxu0 0.0
        %461 = vmatprep.subr.mxu0 0.0
        %462 = vmatpush1.msra.mxu0 0.0
        %463 = vmatprep.subr.mxu0 0.0
        %464 = vmatpush1.msra.mxu0 0.0
        %465 = vmatprep.subr.mxu0 0.0
        %466 = vmatpush1.msra.mxu0 0.0
        %467 = vmatprep.subr.mxu0 0.0
        %468 = vmatpush1.msra.mxu0 0.0
        %469 = vmatprep.subr.mxu0 0.0
        %470 = vmatpush1.msra.mxu0 0.0
        %471 = vmatprep.subr.mxu0 0.0
        %472 = vmatpush1.msra.mxu0 0.0
        %473 = vmatprep.subr.mxu0 0.0
        %474 = vmatpush1.msra.mxu0 0.0
        %475 = vmatprep.subr.mxu0 0.0
        %476 = vmatpush1.msra.mxu0 0.0
        %477 = vmatprep.mubr.f32.mxu0 0.0
        %478 = vmatmul.mubr.f32.gmra.mrb[0].mxu0 %v336
        %v479 = vpop.f32.mrb[0].mxu0
        %v480 = vadd.f32 0.0, %v479
        %v481 = vpop.f32.mrb[0].mxu0
        %482 = vdwg.mxu0
        %483 = vst.msk [vmem:[%s321] sm:$0xff] %vm334, %v480
        %v484 = vld [vmem:[#allocation8] sm:$0xff]
        %v485 = vld [vmem:[#allocation8 + $0x8] sm:$0xff]
        %v486 = vld [vmem:[#allocation8 + $0x10] sm:$0xff]
        %v487 = vld [vmem:[#allocation8 + $0x18] sm:$0xff]
        %488 = vmatprep.subr.mxu0 0.0
        %489 = vmatpush1.msra.mxu0 %v484
        %490 = vmatprep.subr.mxu0 0.0
        %491 = vmatpush1.msra.mxu0 %v485
        %492 = vmatprep.subr.mxu0 0.0
        %493 = vmatpush1.msra.mxu0 %v486
        %494 = vmatprep.subr.mxu0 0.0
        %495 = vmatpush1.msra.mxu0 %v487
        %496 = vmatprep.subr.mxu0 0.0
        %497 = vmatpush1.msra.mxu0 0.0
        %498 = vmatprep.subr.mxu0 0.0
        %499 = vmatpush1.msra.mxu0 0.0
        %500 = vmatprep.subr.mxu0 0.0
        %501 = vmatpush1.msra.mxu0 0.0
        %502 = vmatprep.subr.mxu0 0.0
        %503 = vmatpush1.msra.mxu0 0.0
        %504 = vmatprep.subr.mxu0 0.0
        %505 = vmatpush1.msra.mxu0 0.0
        %506 = vmatprep.subr.mxu0 0.0
        %507 = vmatpush1.msra.mxu0 0.0
        %508 = vmatprep.subr.mxu0 0.0
        %509 = vmatpush1.msra.mxu0 0.0
        %510 = vmatprep.subr.mxu0 0.0
        %511 = vmatpush1.msra.mxu0 0.0
        %512 = vmatprep.subr.mxu0 0.0
        %513 = vmatpush1.msra.mxu0 0.0
        %514 = vmatprep.subr.mxu0 0.0
        %515 = vmatpush1.msra.mxu0 0.0
        %516 = vmatprep.subr.mxu0 0.0
        %517 = vmatpush1.msra.mxu0 0.0
        %518 = vmatprep.subr.mxu0 0.0
        %519 = vmatpush1.msra.mxu0 0.0
        %520 = vmatprep.subr.mxu0 0.0
        %521 = vmatpush1.msra.mxu0 0.0
        %522 = vmatprep.subr.mxu0 0.0
        %523 = vmatpush1.msra.mxu0 0.0
        %524 = vmatprep.subr.mxu0 0.0
        %525 = vmatpush1.msra.mxu0 0.0
        %526 = vmatprep.subr.mxu0 0.0
        %527 = vmatpush1.msra.mxu0 0.0
        %528 = vmatprep.subr.mxu0 0.0
        %529 = vmatpush1.msra.mxu0 0.0
        %530 = vmatprep.subr.mxu0 0.0
        %531 = vmatpush1.msra.mxu0 0.0
        %532 = vmatprep.subr.mxu0 0.0
        %533 = vmatpush1.msra.mxu0 0.0
        %534 = vmatprep.subr.mxu0 0.0
        %535 = vmatpush1.msra.mxu0 0.0
        %536 = vmatprep.subr.mxu0 0.0
        %537 = vmatpush1.msra.mxu0 0.0
        %538 = vmatprep.subr.mxu0 0.0
        %539 = vmatpush1.msra.mxu0 0.0
        %540 = vmatprep.subr.mxu0 0.0
        %541 = vmatpush1.msra.mxu0 0.0
        %542 = vmatprep.subr.mxu0 0.0
        %543 = vmatpush1.msra.mxu0 0.0
        %544 = vmatprep.subr.mxu0 0.0
        %545 = vmatpush1.msra.mxu0 0.0
        %546 = vmatprep.subr.mxu0 0.0
        %547 = vmatpush1.msra.mxu0 0.0
        %548 = vmatprep.subr.mxu0 0.0
        %549 = vmatpush1.msra.mxu0 0.0
        %550 = vmatprep.subr.mxu0 0.0
        %551 = vmatpush1.msra.mxu0 0.0
        %552 = vmatprep.mubr.f32.mxu0 0.0
        %553 = vmatmul.mubr.f32.gmra.mrb[0].mxu0 %v336
        %v554 = vpop.f32.mrb[0].mxu0
        %v555 = vadd.f32 0.0, %v554
        %v556 = vpop.f32.mrb[0].mxu0
        %557 = vdwg.mxu0
        %558 = vst.msk [vmem:[%s328] sm:$0xff] %vm334, %v555
        %s559 = sand.u32 %s126, 1
        %s560 = scalar_lea.sflag [#allocation4], %s559
        %s561 = sand.u32 %s126, 1
        %s562 = smul.addr %s561, 8
        %s563 = scalar_lea.vmem [#allocation10], %s562
        %s564 = sand.u32 %s29, 1
        %s565 = scalar_lea.sflag [#allocation12], %s564
        %s566 = sand.u32 %s152, 1
        %s567 = smul.addr %s566, 8
        %s568 = scalar_lea.vmem [#allocation11], %s567
        %s569 = sand.u32 %s29, 1
        %s570 = scalar_lea.sflag [#allocation12], %s569
        %s571 = sand.u32 %s178, 1
        %s572 = smul.addr %s571, 8
        %s573 = scalar_lea.vmem [#allocation13], %s572
        // Predicated region
        $region53: #{tpu_custom_call.1} parent=35 // pred_check
          %p574 = pneg %p136
        $region54: #{tpu_custom_call.1} parent=35 // pred_check_branch
          %576 = sbr.rel (%p574) target = $region56
        $region55: #{tpu_custom_call.1} parent=35 // pred_region
          %s578 = ssub.s32 128, 128
          %579 = vsyncadd %s560, %s578
          %s580 = smul.addr %s29, 128
          %s581 = scalar_lea.hbm %s4, %s580
          %s583 = sshll.u32 %s563, 4
          %s584 = int_to_ptr.vmem [resolvable:$true] %s583
          %586 = dma.vmem_to_hbm [thread:$0]  %s584, 128, %s581, %s560
        $region56: #{tpu_custom_call.1} parent=35 // pred_fallthru
          _
        // Predicated region
        $region57: #{tpu_custom_call.1} parent=35 // pred_check
          %p587 = pneg %p162
        $region58: #{tpu_custom_call.1} parent=35 // pred_check_branch
          %589 = sbr.rel (%p587) target = $region60
        $region59: #{tpu_custom_call.1} parent=35 // pred_region
          %s591 = ssub.s32 128, 128
          %592 = vsyncadd %s565, %s591
          %s593 = smul.addr %s29, 128
          %s594 = scalar_lea.hbm %s5, %s593
          %s596 = sshll.u32 %s568, 4
          %s597 = int_to_ptr.vmem [resolvable:$true] %s596
          %599 = dma.vmem_to_hbm [thread:$0]  %s597, 128, %s594, %s565
        $region60: #{tpu_custom_call.1} parent=35 // pred_fallthru
          _
        // Predicated region
        $region61: #{tpu_custom_call.1} parent=35 // pred_check
          %p600 = pneg %p188
        $region62: #{tpu_custom_call.1} parent=35 // pred_check_branch
          %602 = sbr.rel (%p600) target = $region64
        $region63: #{tpu_custom_call.1} parent=35 // pred_region
          %s604 = ssub.s32 128, 128
          %605 = vsyncadd %s570, %s604
          %s606 = smul.addr %s29, 128
          %s607 = scalar_lea.hbm %s6, %s606
          %s609 = sshll.u32 %s573, 4
          %s610 = int_to_ptr.vmem [resolvable:$true] %s609
          %612 = dma.vmem_to_hbm [thread:$0]  %s610, 128, %s607, %s570
        $region64: #{tpu_custom_call.1} parent=35 // pred_fallthru
          _
      $region36: #{tpu_custom_call.1} parent=5 // pred_fallthru
        _
      %p613 = scmp.le.s32.totalorder 2, %s24
      // Predicated region
      $region65: #{tpu_custom_call.1} parent=5 // pred_check
        %p614 = pneg %p613
      $region66: #{tpu_custom_call.1} parent=5 // pred_check_branch
        %616 = sbr.rel (%p614) target = $region68
      $region67: #{tpu_custom_call.1} parent=5 // pred_region
        %s617 = ssub.s32 %s24, 2
        // Predicated region
        $region69: #{tpu_custom_call.1} parent=67 // pred_check
          %p618 = pneg %p142
        $region70: #{tpu_custom_call.1} parent=67 // pred_check_branch
          %620 = sbr.rel (%p618) target = $region72
        $region71: #{tpu_custom_call.1} parent=67 // pred_region
          %s621 = sand.u32 %s127, 1
          %s622 = scalar_lea.sflag [#allocation4], %s621
          %s623 = sand.u32 %s127, 1
          %s624 = smul.addr %s623, 8
          %s625 = scalar_lea.vmem [#allocation10], %s624
          %626 = dma.done %s622, 128
        $region72: #{tpu_custom_call.1} parent=67 // pred_fallthru
          _
        // Predicated region
        $region73: #{tpu_custom_call.1} parent=67 // pred_check
          %p627 = pneg %p168
        $region74: #{tpu_custom_call.1} parent=67 // pred_check_branch
          %629 = sbr.rel (%p627) target = $region76
        $region75: #{tpu_custom_call.1} parent=67 // pred_region
          %s630 = sand.u32 %s30, 1
          %s631 = scalar_lea.sflag [#allocation12], %s630
          %s632 = sand.u32 %s153, 1
          %s633 = smul.addr %s632, 8
          %s634 = scalar_lea.vmem [#allocation11], %s633
          %635 = dma.done %s631, 128
        $region76: #{tpu_custom_call.1} parent=67 // pred_fallthru
          _
        // Predicated region
        $region77: #{tpu_custom_call.1} parent=67 // pred_check
          %p636 = pneg %p194
        $region78: #{tpu_custom_call.1} parent=67 // pred_check_branch
          %638 = sbr.rel (%p636) target = $region80
        $region79: #{tpu_custom_call.1} parent=67 // pred_region
          %s639 = sand.u32 %s30, 1
          %s640 = scalar_lea.sflag [#allocation12], %s639
          %s641 = sand.u32 %s179, 1
          %s642 = smul.addr %s641, 8
          %s643 = scalar_lea.vmem [#allocation13], %s642
          %644 = dma.done %s640, 128
        $region80: #{tpu_custom_call.1} parent=67 // pred_fallthru
          _
      $region68: #{tpu_custom_call.1} parent=5 // pred_fallthru
        _
    $region6: #{tpu_custom_call.1} parent=1 // loop_footer
      %s28 = sadd.s32 1, %s24
    $region7: #{tpu_custom_call.1} parent=1 // loop_footer_branch
      %23 = sbr.rel target = $region3
    $region8: #{tpu_custom_call.1} parent=1 // loop_exit
      _
    %645 = vsyncpa [#allocation3], 1
    %s646 = scalar_lea.sflag [#allocation3], 1
    %647 = vsyncpa %s646, 1
    %648 = vsyncpa [#allocation6], 1
    %649 = vsyncpa [#allocation9], 1
    %650 = vsyncpa [#allocation4], 1
    %s651 = scalar_lea.sflag [#allocation4], 1
    %652 = vsyncpa %s651, 1
    %653 = vsyncpa [#allocation12], 1
    %s654 = scalar_lea.sflag [#allocation12], 1
    %655 = vsyncpa %s654, 1

</llo_original>
